<compile_context>
chip_gen: v7x
topology: tpu7x:2x2x1
jax: 0.10.0
libtpu: 0.0.40
codegen_flags: <defaults>
</compile_context>

<pallas_src>
from functools import partial

import numpy as np
import jax
import jax.numpy as jnp
from jax.experimental import pallas as pl
from jax.experimental.pallas import tpu as pltpu


# ---------------------------------------------------------------- helpers ---

_SQRT_HALF = 0.7071067811865476


def _erf_poly(z):
    """Abramowitz & Stegun 7.1.26 erf approximation, |err| <= 1.5e-7 (f32)."""
    a1, a2, a3, a4, a5 = (0.254829592, -0.284496736, 1.421413741,
                          -1.453152027, 1.061405429)
    p = 0.3275911
    za = jnp.abs(z)
    t = 1.0 / (1.0 + p * za)
    poly = ((((a5 * t + a4) * t + a3) * t + a2) * t + a1) * t
    e = 1.0 - poly * jnp.exp(-za * za)
    return jnp.where(z < 0, -e, e)


def _gelu_exact(x):
    """Exact (erf-based) GELU, matching torch.nn.GELU() default."""
    return 0.5 * x * (1.0 + _erf_poly(x * _SQRT_HALF))


def _round_up(v, m):
    return (v + m - 1) // m * m


def _choose_tm(T):
    """Token-tile rows.  Big tiles amortize the ~0.35us per-grid-step overhead
    (with D=32 a 2048-row f32 tile of x is only 256 KiB), but larger problems
    always get >= 2 tiles so the v7x megacore can shard across both cores."""
    if T <= 256:
        return T                              # one tile == full array dims
    return min(2048, _round_up(pl.cdiv(T, 2), 8))


# ----------------------------------------------------------------- kernel ---

def moe_fused_kernel(x_ref, wg_ref, bg_ref, w1_ref, b1_ref, w2_ref, b2_ref,
                     expand_ref, out_ref, logits_ref, *, topk):
    x = x_ref[...]                                            # (tm, D)
    xf = x.astype(jnp.float32)

    # --- gate (fused: x already in VMEM; logits is the 2nd output) ----------
    logits = (jnp.dot(xf, wg_ref[...], preferred_element_type=jnp.float32)
              + bg_ref[...])                                  # (tm, E) f32
    logits_ref[...] = logits.astype(logits_ref.dtype)

    # --- routing: softmax -> top-k -> renormalise (all f32, in-register) ----
    mx = jnp.max(logits, axis=-1, keepdims=True)
    pe = jnp.exp(logits - mx)
    probs = pe / jnp.sum(pe, axis=-1, keepdims=True)          # (tm, E)

    num_e = probs.shape[-1]
    lane = jax.lax.broadcasted_iota(jnp.int32, probs.shape, 1)
    remaining = probs
    sel = jnp.zeros_like(probs)
    for _ in range(topk):                                     # static unroll
        cur = jnp.max(remaining, axis=-1, keepdims=True)
        is_max = remaining >= cur
        # first (lowest-index) max, matching lax.top_k / torch.topk tie order
        first = jnp.min(jnp.where(is_max, lane, num_e), axis=-1, keepdims=True)
        pick = lane == first
        sel = jnp.where(pick, 1.0, sel)
        remaining = jnp.where(pick, -1.0, remaining)          # probs >= 0
    pw = probs * sel
    cw = pw / jnp.sum(pw, axis=-1, keepdims=True)             # dense combine (tm, E)

    # --- fused expert MLPs: bf16 MXU operands, f32 accumulation -------------
    h = (jnp.dot(x.astype(jnp.bfloat16), w1_ref[...],
                 preferred_element_type=jnp.float32) + b1_ref[...])  # (tm, E*H)
    h = _gelu_exact(h)                                                # f32
    # per-hidden-unit combine weights via a tiny block-one-hot matmul
    cw_exp = jnp.dot(cw, expand_ref[...], preferred_element_type=jnp.float32)
    o = jnp.dot((h * cw_exp).astype(jnp.bfloat16), w2_ref[...],
                preferred_element_type=jnp.float32)                   # (tm, D)
    o = o + jnp.dot(cw, b2_ref[...], preferred_element_type=jnp.float32)
    out_ref[...] = o.astype(out_ref.dtype)


# -------------------------------------------------------- parameter prep ----

def prepare_params(wg, bg, w1, b1, w2, b2):
    """One-time re-layout of torch-style Linear weights (setup time, not per
    forward).  Expert weights are concatenated along a lane-dense E*H axis and
    stored bf16 for the MXU; routing/bias tensors stay f32."""
    E, H, D = w1.shape
    wg_t = jnp.asarray(wg, jnp.float32).T                     # (D, E)
    bg_r = jnp.asarray(bg, jnp.float32).reshape(1, E)
    # W1_cat[:, e*H + h] = w1[e, h, :]   (w1[e].T stacked along columns)
    w1_cat = jnp.transpose(jnp.asarray(w1), (2, 0, 1)).reshape(D, E * H)
    b1_cat = jnp.asarray(b1, jnp.float32).reshape(1, E * H)
    # W2_cat[e*H + h, :] = w2[e, :, h]   (w2[e].T stacked along rows)
    w2_cat = jnp.transpose(jnp.asarray(w2), (0, 2, 1)).reshape(E * H, D)
    b2_cat = jnp.asarray(b2, jnp.float32)                     # (E, D)
    # Block one-hot expansion: row e has ones in columns [e*H, (e+1)*H).
    expand = jnp.kron(jnp.eye(E, dtype=jnp.float32),
                      jnp.ones((1, H), jnp.float32))          # (E, E*H)
    return dict(wg=wg_t, bg=bg_r,
                w1=w1_cat.astype(jnp.bfloat16), b1=b1_cat,
                w2=w2_cat.astype(jnp.bfloat16), b2=b2_cat,
                expand=expand)


# ---------------------------------------------------------------- wrapper ---

def naive_moe_forward(x, p, topk):
    B, S, D = x.shape
    T = B * S
    E = p["wg"].shape[1]
    EH = p["w1"].shape[1]                     # E * H

    x2 = x.reshape(T, D)

    tm = _choose_tm(T)
    n_tiles = pl.cdiv(T, tm)
    Tp = n_tiles * tm
    if Tp != T:
        # TODO(synk): mask the ragged last tile in-kernel instead of padding.
        x2 = jnp.pad(x2, ((0, Tp - T), (0, 0)))

    isz = jnp.dtype(x.dtype).itemsize
    weight_bytes = sum(int(np.prod(p[k].shape)) * p[k].dtype.itemsize
                       for k in ("wg", "bg", "w1", "b1", "w2", "b2", "expand"))
    cost = pl.CostEstimate(
        flops=2 * Tp * (D * E + D * EH + E * EH + EH * D + E * D),
        transcendentals=Tp * (EH + E),                 # GELU + softmax exp
        bytes_accessed=int(Tp * D * isz                # x in
                           + Tp * D * isz              # out
                           + Tp * E * isz              # logits
                           + weight_bytes))

    out_p, logits_p = pl.pallas_call(
        partial(moe_fused_kernel, topk=topk),
        out_shape=(jax.ShapeDtypeStruct((Tp, D), x.dtype),
                   jax.ShapeDtypeStruct((Tp, E), x.dtype)),
        grid=(n_tiles,),
        in_specs=[
            pl.BlockSpec((tm, D), lambda i: (i, 0)),    # x tile (streamed)
            pl.BlockSpec((D, E), lambda i: (0, 0)),     # gate weight (resident)
            pl.BlockSpec((1, E), lambda i: (0, 0)),     # gate bias
            pl.BlockSpec((D, EH), lambda i: (0, 0)),    # W1 all experts (bf16)
            pl.BlockSpec((1, EH), lambda i: (0, 0)),    # b1
            pl.BlockSpec((EH, D), lambda i: (0, 0)),    # W2 all experts (bf16)
            pl.BlockSpec((E, D), lambda i: (0, 0)),     # b2
            pl.BlockSpec((E, EH), lambda i: (0, 0)),    # block one-hot expand
        ],
        out_specs=(pl.BlockSpec((tm, D), lambda i: (i, 0)),
                   pl.BlockSpec((tm, E), lambda i: (i, 0))),
        compiler_params=pltpu.CompilerParams(
            dimension_semantics=("parallel",),
            vmem_limit_bytes=48 * 1024 * 1024),
        cost_estimate=cost,
    )(x2, p["wg"], p["bg"], p["w1"], p["b1"], p["w2"], p["b2"], p["expand"])

    if Tp != T:
        out_p = out_p[:T]
        logits_p = logits_p[:T]
    return out_p.reshape(B, S, D), logits_p


# -------------------------------------------------------- pure-JAX reference

def ref_forward(x, params, num_experts, topk):
    B, S, D = x.shape
    wg, bg, w1, b1, w2, b2 = params
    hi = jax.lax.Precision.HIGHEST
    x2 = x.reshape(-1, D)
    logits = jnp.dot(x2, wg.T, precision=hi) + bg
    rw = jax.nn.softmax(logits.astype(jnp.float32), axis=1)
    top_w, sel = jax.lax.top_k(rw, topk)
    top_w = top_w / jnp.sum(top_w, axis=-1, keepdims=True)
    top_w = top_w.astype(x.dtype)
    combine = jnp.sum(jax.nn.one_hot(sel, num_experts, dtype=top_w.dtype)
                      * top_w[..., None], axis=1)
    final = jnp.zeros_like(x2)
    for e in range(num_experts):
        h = jax.nn.gelu(jnp.dot(x2, w1[e].T, precision=hi) + b1[e],
                        approximate=False)
        o = jnp.dot(h, w2[e].T, precision=hi) + b2[e]
        final = final + o * combine[:, e:e + 1]
    return final.reshape(B, S, D), logits


# ------------------------------------------------------------------- main ---

if __name__ == "__main__":
    # num_experts=8, embed_dim=hidden_dim=32 (forward requires embed==hidden),
    # topk=4 (fixed by the module), batch=2, seq=8.
    B, S, E, D, H, K = 2, 8, 8, 32, 32, 4

    key = jax.random.PRNGKey(0)
    ks = jax.random.split(key, 7)
    x = jax.random.normal(ks[0], (B, S, D), jnp.float32)
    wg = jax.random.normal(ks[1], (E, D), jnp.float32) * 0.1     # gate Linear(D, E)
    bg = jax.random.normal(ks[2], (E,), jnp.float32) * 0.1
    w1 = jax.random.normal(ks[3], (E, H, D), jnp.float32) * 0.1  # Linear(D, H) / expert
    b1 = jax.random.normal(ks[4], (E, H), jnp.float32) * 0.1
    w2 = jax.random.normal(ks[5], (E, D, H), jnp.float32) * 0.1  # Linear(H, D) / expert
    b2 = jax.random.normal(ks[6], (E, D), jnp.float32) * 0.1
    params = (wg, bg, w1, b1, w2, b2)

    # One-time parameter re-layout (setup time, outside the forward path).
    prepped = prepare_params(*params)

    fwd = jax.jit(lambda xx: naive_moe_forward(xx, prepped, K))
    out, logits = fwd(x)
    jax.block_until_ready((out, logits))

    ref_out, ref_logits = ref_forward(x, params, E, K)
    assert np.allclose(np.asarray(logits), np.asarray(ref_logits),
                       rtol=5e-3, atol=5e-3), "gate logits mismatch"
    # bf16 MXU operands in the expert matmuls -> loosened output tolerance.
    assert np.allclose(np.asarray(out), np.asarray(ref_out),
                       rtol=2e-2, atol=2e-2), "MoE output mismatch"

    print("KERNEL_OK")
</pallas_src>

<mosaic_0001>
module attributes {stable_mosaic.version = 11 : i64} {
  func.func @moe_fused_kernel(%arg0: i32, %arg1: memref<16x32xf32, #tpu.memory_space<vmem>>, %arg2: memref<32x8xf32, #tpu.memory_space<vmem>>, %arg3: memref<1x8xf32, #tpu.memory_space<vmem>>, %arg4: memref<32x256xbf16, #tpu.memory_space<vmem>>, %arg5: memref<1x256xf32, #tpu.memory_space<vmem>>, %arg6: memref<256x32xbf16, #tpu.memory_space<vmem>>, %arg7: memref<8x32xf32, #tpu.memory_space<vmem>>, %arg8: memref<8x256xf32, #tpu.memory_space<vmem>>, %arg9: memref<16x32xf32, #tpu.memory_space<vmem>>, %arg10: memref<16x8xf32, #tpu.memory_space<vmem>>) attributes {dimension_semantics = [#tpu.dimension_semantics<parallel>], iteration_bounds = array<i64: 1>, scalar_prefetch = 0 : i64, scratch_operands = 0 : i64, tpu.core_type = #tpu.core_type<tc>, window_params = [{transform_indices = @transform_0, window_bounds = array<i64: 16, 32>}, {pipeline_mode = #tpu.pipeline_mode<synchronous>, transform_indices = @transform_1, window_bounds = array<i64: 32, 8>}, {pipeline_mode = #tpu.pipeline_mode<synchronous>, transform_indices = @transform_2, window_bounds = array<i64: 1, 8>}, {pipeline_mode = #tpu.pipeline_mode<synchronous>, transform_indices = @transform_3, window_bounds = array<i64: 32, 256>}, {pipeline_mode = #tpu.pipeline_mode<synchronous>, transform_indices = @transform_4, window_bounds = array<i64: 1, 256>}, {pipeline_mode = #tpu.pipeline_mode<synchronous>, transform_indices = @transform_5, window_bounds = array<i64: 256, 32>}, {pipeline_mode = #tpu.pipeline_mode<synchronous>, transform_indices = @transform_6, window_bounds = array<i64: 8, 32>}, {pipeline_mode = #tpu.pipeline_mode<synchronous>, transform_indices = @transform_7, window_bounds = array<i64: 8, 256>}, {transform_indices = @transform_8, window_bounds = array<i64: 16, 32>}, {transform_indices = @transform_9, window_bounds = array<i64: 16, 8>}]} {
    %c0 = arith.constant 0 : index
    %c0_0 = arith.constant 0 : index
    %0 = vector.load %arg1[%c0, %c0_0] : memref<16x32xf32, #tpu.memory_space<vmem>>, vector<16x32xf32>
    %c0_1 = arith.constant 0 : index
    %c0_2 = arith.constant 0 : index
    %1 = vector.load %arg2[%c0_1, %c0_2] : memref<32x8xf32, #tpu.memory_space<vmem>>, vector<32x8xf32>
    %cst = arith.constant dense<0.000000e+00> : vector<16x8xf32>
    %2 = tpu.matmul %0, %1, %cst {dimension_numbers = #tpu.dot_dimension_numbers<[1], [0], [0], [1], [0, 0, 1, 1], [], []>} : vector<16x32xf32>, vector<32x8xf32>, vector<16x8xf32> -> vector<16x8xf32>
    %c0_3 = arith.constant 0 : index
    %c0_4 = arith.constant 0 : index
    %3 = vector.load %arg3[%c0_3, %c0_4] : memref<1x8xf32, #tpu.memory_space<vmem>>, vector<1x8xf32>
    %4 = vector.broadcast %3 : vector<1x8xf32> to vector<16x8xf32>
    %5 = arith.addf %2, %4 : vector<16x8xf32>
    %c0_5 = arith.constant 0 : index
    %c0_6 = arith.constant 0 : index
    %6 = vector.load %arg10[%c0_5, %c0_6] : memref<16x8xf32, #tpu.memory_space<vmem>>, vector<16x8xf32>
    tpu.vector_store %arg10[%c0_5, %c0_6], %5 {strides = array<i32>} : memref<16x8xf32, #tpu.memory_space<vmem>>, vector<16x8xf32>,
    %cst_7 = arith.constant dense<0xFF800000> : vector<16xf32>
    %7 = vector.multi_reduction <maximumf>, %5, %cst_7 [1] : vector<16x8xf32> to vector<16xf32>
    %8 = vector.shape_cast %7 : vector<16xf32> to vector<16x1xf32>
    %9 = vector.broadcast %8 : vector<16x1xf32> to vector<16x8xf32>
    %10 = arith.subf %5, %9 : vector<16x8xf32>
    %11 = math.exp %10 : vector<16x8xf32>
    %cst_8 = arith.constant dense<0.000000e+00> : vector<16xf32>
    %12 = vector.multi_reduction <add>, %11, %cst_8 [1] : vector<16x8xf32> to vector<16xf32>
    %13 = vector.shape_cast %12 : vector<16xf32> to vector<16x1xf32>
    %14 = vector.broadcast %13 : vector<16x1xf32> to vector<16x8xf32>
    %15 = arith.divf %11, %14 : vector<16x8xf32>
    %16 = tpu.iota {dimensions = array<i32: 1>} : vector<16x8xi32>
    %cst_9 = arith.constant 0.000000e+00 : f32
    %17 = vector.broadcast %cst_9 : f32 to vector<16x8xf32>
    %cst_10 = arith.constant dense<0xFF800000> : vector<16xf32>
    %18 = vector.multi_reduction <maximumf>, %15, %cst_10 [1] : vector<16x8xf32> to vector<16xf32>
    %19 = vector.shape_cast %18 : vector<16xf32> to vector<16x1xf32>
    %20 = vector.broadcast %19 : vector<16x1xf32> to vector<16x8xf32>
    %21 = arith.cmpf oge, %15, %20 : vector<16x8xf32>
    %c8_i32 = arith.constant 8 : i32
    %22 = vector.broadcast %c8_i32 : i32 to vector<16x8xi32>
    %23 = arith.select %21, %16, %22 : vector<16x8xi1>, vector<16x8xi32>
    %cst_11 = arith.constant dense<2147483647> : vector<16xi32>
    %24 = vector.multi_reduction <minsi>, %23, %cst_11 [1] : vector<16x8xi32> to vector<16xi32>
    %25 = vector.shape_cast %24 : vector<16xi32> to vector<16x1xi32>
    %26 = vector.broadcast %25 : vector<16x1xi32> to vector<16x8xi32>
    %27 = arith.cmpi eq, %16, %26 : vector<16x8xi32>
    %cst_12 = arith.constant 1.000000e+00 : f32
    %28 = vector.broadcast %cst_12 : f32 to vector<16x8xf32>
    %29 = arith.select %27, %28, %17 : vector<16x8xi1>, vector<16x8xf32>
    %cst_13 = arith.constant -1.000000e+00 : f32
    %30 = vector.broadcast %cst_13 : f32 to vector<16x8xf32>
    %31 = arith.select %27, %30, %15 : vector<16x8xi1>, vector<16x8xf32>
    %cst_14 = arith.constant dense<0xFF800000> : vector<16xf32>
    %32 = vector.multi_reduction <maximumf>, %31, %cst_14 [1] : vector<16x8xf32> to vector<16xf32>
    %33 = vector.shape_cast %32 : vector<16xf32> to vector<16x1xf32>
    %34 = vector.broadcast %33 : vector<16x1xf32> to vector<16x8xf32>
    %35 = arith.cmpf oge, %31, %34 : vector<16x8xf32>
    %c8_i32_15 = arith.constant 8 : i32
    %36 = vector.broadcast %c8_i32_15 : i32 to vector<16x8xi32>
    %37 = arith.select %35, %16, %36 : vector<16x8xi1>, vector<16x8xi32>
    %cst_16 = arith.constant dense<2147483647> : vector<16xi32>
    %38 = vector.multi_reduction <minsi>, %37, %cst_16 [1] : vector<16x8xi32> to vector<16xi32>
    %39 = vector.shape_cast %38 : vector<16xi32> to vector<16x1xi32>
    %40 = vector.broadcast %39 : vector<16x1xi32> to vector<16x8xi32>
    %41 = arith.cmpi eq, %16, %40 : vector<16x8xi32>
    %cst_17 = arith.constant 1.000000e+00 : f32
    %42 = vector.broadcast %cst_17 : f32 to vector<16x8xf32>
    %43 = arith.select %41, %42, %29 : vector<16x8xi1>, vector<16x8xf32>
    %cst_18 = arith.constant -1.000000e+00 : f32
    %44 = vector.broadcast %cst_18 : f32 to vector<16x8xf32>
    %45 = arith.select %41, %44, %31 : vector<16x8xi1>, vector<16x8xf32>
    %cst_19 = arith.constant dense<0xFF800000> : vector<16xf32>
    %46 = vector.multi_reduction <maximumf>, %45, %cst_19 [1] : vector<16x8xf32> to vector<16xf32>
    %47 = vector.shape_cast %46 : vector<16xf32> to vector<16x1xf32>
    %48 = vector.broadcast %47 : vector<16x1xf32> to vector<16x8xf32>
    %49 = arith.cmpf oge, %45, %48 : vector<16x8xf32>
    %c8_i32_20 = arith.constant 8 : i32
    %50 = vector.broadcast %c8_i32_20 : i32 to vector<16x8xi32>
    %51 = arith.select %49, %16, %50 : vector<16x8xi1>, vector<16x8xi32>
    %cst_21 = arith.constant dense<2147483647> : vector<16xi32>
    %52 = vector.multi_reduction <minsi>, %51, %cst_21 [1] : vector<16x8xi32> to vector<16xi32>
    %53 = vector.shape_cast %52 : vector<16xi32> to vector<16x1xi32>
    %54 = vector.broadcast %53 : vector<16x1xi32> to vector<16x8xi32>
    %55 = arith.cmpi eq, %16, %54 : vector<16x8xi32>
    %cst_22 = arith.constant 1.000000e+00 : f32
    %56 = vector.broadcast %cst_22 : f32 to vector<16x8xf32>
    %57 = arith.select %55, %56, %43 : vector<16x8xi1>, vector<16x8xf32>
    %cst_23 = arith.constant -1.000000e+00 : f32
    %58 = vector.broadcast %cst_23 : f32 to vector<16x8xf32>
    %59 = arith.select %55, %58, %45 : vector<16x8xi1>, vector<16x8xf32>
    %cst_24 = arith.constant dense<0xFF800000> : vector<16xf32>
    %60 = vector.multi_reduction <maximumf>, %59, %cst_24 [1] : vector<16x8xf32> to vector<16xf32>
    %61 = vector.shape_cast %60 : vector<16xf32> to vector<16x1xf32>
    %62 = vector.broadcast %61 : vector<16x1xf32> to vector<16x8xf32>
    %63 = arith.cmpf oge, %59, %62 : vector<16x8xf32>
    %c8_i32_25 = arith.constant 8 : i32
    %64 = vector.broadcast %c8_i32_25 : i32 to vector<16x8xi32>
    %65 = arith.select %63, %16, %64 : vector<16x8xi1>, vector<16x8xi32>
    %cst_26 = arith.constant dense<2147483647> : vector<16xi32>
    %66 = vector.multi_reduction <minsi>, %65, %cst_26 [1] : vector<16x8xi32> to vector<16xi32>
    %67 = vector.shape_cast %66 : vector<16xi32> to vector<16x1xi32>
    %68 = vector.broadcast %67 : vector<16x1xi32> to vector<16x8xi32>
    %69 = arith.cmpi eq, %16, %68 : vector<16x8xi32>
    %cst_27 = arith.constant 1.000000e+00 : f32
    %70 = vector.broadcast %cst_27 : f32 to vector<16x8xf32>
    %71 = arith.select %69, %70, %57 : vector<16x8xi1>, vector<16x8xf32>
    %72 = arith.mulf %15, %71 : vector<16x8xf32>
    %cst_28 = arith.constant dense<0.000000e+00> : vector<16xf32>
    %73 = vector.multi_reduction <add>, %72, %cst_28 [1] : vector<16x8xf32> to vector<16xf32>
    %74 = vector.shape_cast %73 : vector<16xf32> to vector<16x1xf32>
    %75 = vector.broadcast %74 : vector<16x1xf32> to vector<16x8xf32>
    %76 = arith.divf %72, %75 : vector<16x8xf32>
    %77 = arith.truncf %0 : vector<16x32xf32> to vector<16x32xbf16>
    %c0_29 = arith.constant 0 : index
    %c0_30 = arith.constant 0 : index
    %78 = vector.load %arg4[%c0_29, %c0_30] : memref<32x256xbf16, #tpu.memory_space<vmem>>, vector<32x256xbf16>
    %cst_31 = arith.constant dense<0.000000e+00> : vector<16x256xf32>
    %79 = tpu.matmul %77, %78, %cst_31 {dimension_numbers = #tpu.dot_dimension_numbers<[1], [0], [0], [1], [0, 0, 1, 1], [], []>} : vector<16x32xbf16>, vector<32x256xbf16>, vector<16x256xf32> -> vector<16x256xf32>
    %c0_32 = arith.constant 0 : index
    %c0_33 = arith.constant 0 : index
    %80 = vector.load %arg5[%c0_32, %c0_33] : memref<1x256xf32, #tpu.memory_space<vmem>>, vector<1x256xf32>
    %81 = vector.broadcast %80 : vector<1x256xf32> to vector<16x256xf32>
    %82 = arith.addf %79, %81 : vector<16x256xf32>
    %cst_34 = arith.constant 5.000000e-01 : f32
    %83 = vector.broadcast %cst_34 : f32 to vector<16x256xf32>
    %84 = arith.mulf %83, %82 : vector<16x256xf32>
    %cst_35 = arith.constant 0.707106769 : f32
    %85 = vector.broadcast %cst_35 : f32 to vector<16x256xf32>
    %86 = arith.mulf %82, %85 : vector<16x256xf32>
    %87 = math.absf %86 : vector<16x256xf32>
    %cst_36 = arith.constant 0.327591091 : f32
    %88 = vector.broadcast %cst_36 : f32 to vector<16x256xf32>
    %89 = arith.mulf %88, %87 : vector<16x256xf32>
    %cst_37 = arith.constant 1.000000e+00 : f32
    %90 = vector.broadcast %cst_37 : f32 to vector<16x256xf32>
    %91 = arith.addf %90, %89 : vector<16x256xf32>
    %cst_38 = arith.constant 1.000000e+00 : f32
    %92 = vector.broadcast %cst_38 : f32 to vector<16x256xf32>
    %93 = arith.divf %92, %91 : vector<16x256xf32>
    %cst_39 = arith.constant 1.06140542 : f32
    %94 = vector.broadcast %cst_39 : f32 to vector<16x256xf32>
    %95 = arith.mulf %94, %93 : vector<16x256xf32>
    %cst_40 = arith.constant -1.45315206 : f32
    %96 = vector.broadcast %cst_40 : f32 to vector<16x256xf32>
    %97 = arith.addf %95, %96 : vector<16x256xf32>
    %98 = arith.mulf %97, %93 : vector<16x256xf32>
    %cst_41 = arith.constant 1.42141378 : f32
    %99 = vector.broadcast %cst_41 : f32 to vector<16x256xf32>
    %100 = arith.addf %98, %99 : vector<16x256xf32>
    %101 = arith.mulf %100, %93 : vector<16x256xf32>
    %cst_42 = arith.constant -0.284496725 : f32
    %102 = vector.broadcast %cst_42 : f32 to vector<16x256xf32>
    %103 = arith.addf %101, %102 : vector<16x256xf32>
    %104 = arith.mulf %103, %93 : vector<16x256xf32>
    %cst_43 = arith.constant 0.254829586 : f32
    %105 = vector.broadcast %cst_43 : f32 to vector<16x256xf32>
    %106 = arith.addf %104, %105 : vector<16x256xf32>
    %107 = arith.mulf %106, %93 : vector<16x256xf32>
    %cst_44 = arith.constant 0.000000e+00 : f32
    %108 = vector.broadcast %cst_44 : f32 to vector<16x256xf32>
    %109 = arith.subf %108, %87 : vector<16x256xf32>
    %110 = arith.mulf %109, %87 : vector<16x256xf32>
    %111 = math.exp %110 : vector<16x256xf32>
    %112 = arith.mulf %107, %111 : vector<16x256xf32>
    %cst_45 = arith.constant 1.000000e+00 : f32
    %113 = vector.broadcast %cst_45 : f32 to vector<16x256xf32>
    %114 = arith.subf %113, %112 : vector<16x256xf32>
    %cst_46 = arith.constant 0.000000e+00 : f32
    %115 = vector.broadcast %cst_46 : f32 to vector<16x256xf32>
    %116 = arith.cmpf olt, %86, %115 : vector<16x256xf32>
    %cst_47 = arith.constant 0.000000e+00 : f32
    %117 = vector.broadcast %cst_47 : f32 to vector<16x256xf32>
    %118 = arith.subf %117, %114 : vector<16x256xf32>
    %119 = arith.select %116, %118, %114 : vector<16x256xi1>, vector<16x256xf32>
    %cst_48 = arith.constant 1.000000e+00 : f32
    %120 = vector.broadcast %cst_48 : f32 to vector<16x256xf32>
    %121 = arith.addf %120, %119 : vector<16x256xf32>
    %122 = arith.mulf %84, %121 : vector<16x256xf32>
    %c0_49 = arith.constant 0 : index
    %c0_50 = arith.constant 0 : index
    %123 = vector.load %arg8[%c0_49, %c0_50] : memref<8x256xf32, #tpu.memory_space<vmem>>, vector<8x256xf32>
    %cst_51 = arith.constant dense<0.000000e+00> : vector<16x256xf32>
    %124 = tpu.matmul %76, %123, %cst_51 {dimension_numbers = #tpu.dot_dimension_numbers<[1], [0], [0], [1], [0, 0, 1, 1], [], []>} : vector<16x8xf32>, vector<8x256xf32>, vector<16x256xf32> -> vector<16x256xf32>
    %125 = arith.mulf %122, %124 : vector<16x256xf32>
    %126 = arith.truncf %125 : vector<16x256xf32> to vector<16x256xbf16>
    %c0_52 = arith.constant 0 : index
    %c0_53 = arith.constant 0 : index
    %127 = vector.load %arg6[%c0_52, %c0_53] : memref<256x32xbf16, #tpu.memory_space<vmem>>, vector<256x32xbf16>
    %cst_54 = arith.constant dense<0.000000e+00> : vector<16x32xf32>
    %128 = tpu.matmul %126, %127, %cst_54 {dimension_numbers = #tpu.dot_dimension_numbers<[1], [0], [0], [1], [0, 0, 1, 1], [], []>} : vector<16x256xbf16>, vector<256x32xbf16>, vector<16x32xf32> -> vector<16x32xf32>
    %c0_55 = arith.constant 0 : index
    %c0_56 = arith.constant 0 : index
    %129 = vector.load %arg7[%c0_55, %c0_56] : memref<8x32xf32, #tpu.memory_space<vmem>>, vector<8x32xf32>
    %cst_57 = arith.constant dense<0.000000e+00> : vector<16x32xf32>
    %130 = tpu.matmul %76, %129, %cst_57 {dimension_numbers = #tpu.dot_dimension_numbers<[1], [0], [0], [1], [0, 0, 1, 1], [], []>} : vector<16x8xf32>, vector<8x32xf32>, vector<16x32xf32> -> vector<16x32xf32>
    %131 = arith.addf %128, %130 : vector<16x32xf32>
    %c0_58 = arith.constant 0 : index
    %c0_59 = arith.constant 0 : index
    %132 = vector.load %arg9[%c0_58, %c0_59] : memref<16x32xf32, #tpu.memory_space<vmem>>, vector<16x32xf32>
    tpu.vector_store %arg9[%c0_58, %c0_59], %131 {strides = array<i32>} : memref<16x32xf32, #tpu.memory_space<vmem>>, vector<16x32xf32>,
    return
  }
  func.func @transform_0(%arg0: i32) -> (i32, i32) {
    %c0_i32 = arith.constant 0 : i32
    %c0_i32_0 = arith.constant 0 : i32
    return %arg0, %c0_i32 : i32, i32
  }
  func.func @transform_1(%arg0: i32) -> (i32, i32) {
    %c0_i32 = arith.constant 0 : i32
    %c0_i32_0 = arith.constant 0 : i32
    %c0_i32_1 = arith.constant 0 : i32
    return %c0_i32, %c0_i32_0 : i32, i32
  }
  func.func @transform_2(%arg0: i32) -> (i32, i32) {
    %c0_i32 = arith.constant 0 : i32
    %c0_i32_0 = arith.constant 0 : i32
    %c0_i32_1 = arith.constant 0 : i32
    return %c0_i32, %c0_i32_0 : i32, i32
  }
  func.func @transform_3(%arg0: i32) -> (i32, i32) {
    %c0_i32 = arith.constant 0 : i32
    %c0_i32_0 = arith.constant 0 : i32
    %c0_i32_1 = arith.constant 0 : i32
    return %c0_i32, %c0_i32_0 : i32, i32
  }
  func.func @transform_4(%arg0: i32) -> (i32, i32) {
    %c0_i32 = arith.constant 0 : i32
    %c0_i32_0 = arith.constant 0 : i32
    %c0_i32_1 = arith.constant 0 : i32
    return %c0_i32, %c0_i32_0 : i32, i32
  }
  func.func @transform_5(%arg0: i32) -> (i32, i32) {
    %c0_i32 = arith.constant 0 : i32
    %c0_i32_0 = arith.constant 0 : i32
    %c0_i32_1 = arith.constant 0 : i32
    return %c0_i32, %c0_i32_0 : i32, i32
  }
  func.func @transform_6(%arg0: i32) -> (i32, i32) {
    %c0_i32 = arith.constant 0 : i32
    %c0_i32_0 = arith.constant 0 : i32
    %c0_i32_1 = arith.constant 0 : i32
    return %c0_i32, %c0_i32_0 : i32, i32
  }
  func.func @transform_7(%arg0: i32) -> (i32, i32) {
    %c0_i32 = arith.constant 0 : i32
    %c0_i32_0 = arith.constant 0 : i32
    %c0_i32_1 = arith.constant 0 : i32
    return %c0_i32, %c0_i32_0 : i32, i32
  }
  func.func @transform_8(%arg0: i32) -> (i32, i32) {
    %c0_i32 = arith.constant 0 : i32
    %c0_i32_0 = arith.constant 0 : i32
    return %arg0, %c0_i32 : i32, i32
  }
  func.func @transform_9(%arg0: i32) -> (i32, i32) {
    %c0_i32 = arith.constant 0 : i32
    %c0_i32_0 = arith.constant 0 : i32
    return %arg0, %c0_i32 : i32, i32
  }
}

</mosaic_0001>

<llo_original>
// kernel: _lambda_.1
$region0: #{_lambda_.1}
  #allocation0 [shape = 'u32[]', space=smem, size = 0x4, offset = 0x4, fixed_abs, tag = 'smem constant byte address 0x4 - core index']
  #allocation1 [shape = 'u32[144,128]{1,0:T(1,128)}', space=vmem, size = 0x12000, scoped, tag = 'internal scratch']
  %s0 = inlined_call_operand.vmem [shape: f32[16,32], index: 0, kind: input, shape index: {}]
  %s1 = inlined_call_operand.vmem [shape: f32[32,8], index: 1, kind: input, shape index: {}]
  %s2 = inlined_call_operand.vmem [shape: f32[1,8], index: 2, kind: input, shape index: {}]
  %s3 = inlined_call_operand.vmem [shape: bf16[32,256], index: 3, kind: input, shape index: {}]
  %s4 = inlined_call_operand.vmem [shape: f32[1,256], index: 4, kind: input, shape index: {}]
  %s5 = inlined_call_operand.hbm [shape: bf16[256,32], index: 5, kind: input, shape index: {}]
  %s6 = inlined_call_operand.vmem [shape: f32[8,32], index: 6, kind: input, shape index: {}]
  %s7 = inlined_call_operand.vmem [shape: f32[8,256], index: 7, kind: input, shape index: {}]
  %s8 = inlined_call_operand.hbm [shape: f32[16,32], index: 8, kind: output, shape index: {0}]
  %s9 = inlined_call_operand.vmem [shape: f32[16,8], index: 9, kind: output, shape index: {1}]
  %10 = xla_tuple %s8, %s9
  %s11 = sld [smem:[#allocation0]]
  $region54: #{_lambda_.1} parent=0
    _
  %s13 = ssub.s32 1, %s11
  %s14 = scalar_select 0, %s13, %s11
  $region1: #{_lambda_.1} parent=0
    #allocation2 [shape = 'u8[65536]{0}', space=vmem, size = 0x10000, scoped, tag = 'input window, operand 5, single buffered']
    #allocation3 [shape = 's32[1]{0}', space=sflag, size = 0x4, scoped, tag = 'scoped memory for _lambda_.1']
    #allocation4 [shape = 's32[1]{0}', space=sflag, size = 0x4, scoped, tag = 'scoped memory for _lambda_.1']
    #allocation5 [shape = 'u8[8192]{0}', space=vmem, size = 0x2000, scoped, tag = 'output window, operand 0, single buffered']
    %15 = vsyncpa [#allocation3], 0
    %16 = vsyncpa [#allocation4], 0
    // Predicated region
    $region2: #{_lambda_.1} parent=1 // pred_check
      _
    $region3: #{_lambda_.1} parent=1 // pred_check_branch
      %18 = sbr.rel (0) target = $region5
    $region4: #{_lambda_.1} parent=1 // pred_region
      _
    $region5: #{_lambda_.1} parent=1 // pred_fallthru
      _
    // Predicated region
    $region6: #{_lambda_.1} parent=1 // pred_check
      _
    $region7: #{_lambda_.1} parent=1 // pred_check_branch
      %20 = sbr.rel (0) target = $region9
    $region8: #{_lambda_.1} parent=1 // pred_region
      _
    $region9: #{_lambda_.1} parent=1 // pred_fallthru
      _
    // Predicated region
    $region10: #{_lambda_.1} parent=1 // pred_check
      _
    $region11: #{_lambda_.1} parent=1 // pred_check_branch
      %22 = sbr.rel (0) target = $region13
    $region12: #{_lambda_.1} parent=1 // pred_region
      _
    $region13: #{_lambda_.1} parent=1 // pred_fallthru
      _
    // Predicated region
    $region14: #{_lambda_.1} parent=1 // pred_check
      _
    $region15: #{_lambda_.1} parent=1 // pred_check_branch
      %24 = sbr.rel (0) target = $region17
    $region16: #{_lambda_.1} parent=1 // pred_region
      _
    $region17: #{_lambda_.1} parent=1 // pred_fallthru
      _
    // Predicated region
    $region18: #{_lambda_.1} parent=1 // pred_check
      _
    $region19: #{_lambda_.1} parent=1 // pred_check_branch
      %26 = sbr.rel (0) target = $region21
    $region20: #{_lambda_.1} parent=1 // pred_region
      _
    $region21: #{_lambda_.1} parent=1 // pred_fallthru
      _
    // Predicated region
    $region22: #{_lambda_.1} parent=1 // pred_check
      _
    $region23: #{_lambda_.1} parent=1 // pred_check_branch
      %28 = sbr.rel (0) target = $region25
    $region24: #{_lambda_.1} parent=1 // pred_region
      %s30 = ssub.s32 2048, 2048
      %31 = vsyncadd [#allocation3], %s30
      %s32 = sshll.u32 [#allocation2], 4
      %s33 = int_to_ptr.vmem [resolvable:$true] %s32
      %38 = dma.hbm_to_vmem [thread:$0]  %s5, 2048, %s33, [#allocation3], 64, 64, 4
    $region25: #{_lambda_.1} parent=1 // pred_fallthru
      _
    // Predicated region
    $region26: #{_lambda_.1} parent=1 // pred_check
      _
    $region27: #{_lambda_.1} parent=1 // pred_check_branch
      %40 = sbr.rel (0) target = $region29
    $region28: #{_lambda_.1} parent=1 // pred_region
      _
    $region29: #{_lambda_.1} parent=1 // pred_fallthru
      _
    // Predicated region
    $region30: #{_lambda_.1} parent=1 // pred_check
      _
    $region31: #{_lambda_.1} parent=1 // pred_check_branch
      %42 = sbr.rel (0) target = $region33
    $region32: #{_lambda_.1} parent=1 // pred_region
      _
    $region33: #{_lambda_.1} parent=1 // pred_fallthru
      _
    // Predicated region
    $region34: #{_lambda_.1} parent=1 // pred_check
      _
    $region35: #{_lambda_.1} parent=1 // pred_check_branch
      %44 = sbr.rel (0) target = $region37
    $region36: #{_lambda_.1} parent=1 // pred_region
      %45 = dma.done [#allocation3], 2048
    $region37: #{_lambda_.1} parent=1 // pred_fallthru
      _
    %v47 = vld [vmem:[%s0] sm:$0xff]
    %v48 = vld [vmem:[%s0 + $0x8] sm:$0xff]
    %v49 = vld [vmem:[%s1] sm:$0xff]
    %v50 = vld [vmem:[%s1 + $0x8] sm:$0xff]
    %v51 = vld [vmem:[%s1 + $0x10] sm:$0xff]
    %v52 = vld [vmem:[%s1 + $0x18] sm:$0xff]
    %v53 = vld [vmem:[%s2] sm:$0x1]
    %v55 = vlaneseq
    %v56 = vshrl.u32 %v55, 7
    %v57 = vsub.s32 0, %v56
    %v58 = vrot.slane %v53, %v57
    %vm60 = vcmask 261120
    %v62 = vsel %vm60, %v47, 0
    %v65 = vsel %vm60, %v48, 0
    %67 = vmatprep.subr.mxu0 0.0
    %68 = vmatpush1.msra.mxu0 %v49
    %69 = vmatprep.subr.mxu0 0.0
    %70 = vmatpush1.msra.mxu0 %v50
    %71 = vmatprep.subr.mxu0 0.0
    %72 = vmatpush1.msra.mxu0 %v51
    %73 = vmatprep.subr.mxu0 0.0
    %74 = vmatpush1.msra.mxu0 %v52
    %75 = vmatprep.subr.mxu0 0.0
    %76 = vmatpush1.msra.mxu0 0.0
    %77 = vmatprep.subr.mxu0 0.0
    %78 = vmatpush1.msra.mxu0 0.0
    %79 = vmatprep.subr.mxu0 0.0
    %80 = vmatpush1.msra.mxu0 0.0
    %81 = vmatprep.subr.mxu0 0.0
    %82 = vmatpush1.msra.mxu0 0.0
    %83 = vmatprep.subr.mxu0 0.0
    %84 = vmatpush1.msra.mxu0 0.0
    %85 = vmatprep.subr.mxu0 0.0
    %86 = vmatpush1.msra.mxu0 0.0
    %87 = vmatprep.subr.mxu0 0.0
    %88 = vmatpush1.msra.mxu0 0.0
    %89 = vmatprep.subr.mxu0 0.0
    %90 = vmatpush1.msra.mxu0 0.0
    %91 = vmatprep.subr.mxu0 0.0
    %92 = vmatpush1.msra.mxu0 0.0
    %93 = vmatprep.subr.mxu0 0.0
    %94 = vmatpush1.msra.mxu0 0.0
    %95 = vmatprep.subr.mxu0 0.0
    %96 = vmatpush1.msra.mxu0 0.0
    %97 = vmatprep.subr.mxu0 0.0
    %98 = vmatpush1.msra.mxu0 0.0
    %99 = vmatprep.subr.mxu0 0.0
    %100 = vmatpush1.msra.mxu0 0.0
    %101 = vmatprep.subr.mxu0 0.0
    %102 = vmatpush1.msra.mxu0 0.0
    %103 = vmatprep.subr.mxu0 0.0
    %104 = vmatpush1.msra.mxu0 0.0
    %105 = vmatprep.subr.mxu0 0.0
    %106 = vmatpush1.msra.mxu0 0.0
    %107 = vmatprep.subr.mxu0 0.0
    %108 = vmatpush1.msra.mxu0 0.0
    %109 = vmatprep.subr.mxu0 0.0
    %110 = vmatpush1.msra.mxu0 0.0
    %111 = vmatprep.subr.mxu0 0.0
    %112 = vmatpush1.msra.mxu0 0.0
    %113 = vmatprep.subr.mxu0 0.0
    %114 = vmatpush1.msra.mxu0 0.0
    %115 = vmatprep.subr.mxu0 0.0
    %116 = vmatpush1.msra.mxu0 0.0
    %117 = vmatprep.subr.mxu0 0.0
    %118 = vmatpush1.msra.mxu0 0.0
    %119 = vmatprep.subr.mxu0 0.0
    %120 = vmatpush1.msra.mxu0 0.0
    %121 = vmatprep.subr.mxu0 0.0
    %122 = vmatpush1.msra.mxu0 0.0
    %123 = vmatprep.subr.mxu0 0.0
    %124 = vmatpush1.msra.mxu0 0.0
    %125 = vmatprep.subr.mxu0 0.0
    %126 = vmatpush1.msra.mxu0 0.0
    %127 = vmatprep.subr.mxu0 0.0
    %128 = vmatpush1.msra.mxu0 0.0
    %129 = vmatprep.subr.mxu0 0.0
    %130 = vmatpush1.msra.mxu0 0.0
    %131 = vmatprep.mubr.f32.mxu0 0.0
    %132 = vmatmul.mubr.f32.gmra.mrb[0].mxu0 %v62
    %v133 = vpop.f32.mrb[0].mxu0
    %v134 = vadd.f32 %v58, %v133
    %v135 = vpop.f32.mrb[0].mxu0
    %136 = vmatprep.mubr.f32.mxu0 0.0
    %137 = vmatmul.mubr.f32.gmra.mrb[0].mxu0 %v65
    %v138 = vpop.f32.mrb[0].mxu0
    %v139 = vadd.f32 %v58, %v138
    %v140 = vpop.f32.mrb[0].mxu0
    %141 = vdwg.mxu0
    %vm142 = vcmask 64512
    %143 = vst.msk [vmem:[%s9] sm:$0xff] %vm142, %v134
    %144 = vst.msk [vmem:[%s9 + $0x8] sm:$0xff] %vm142, %v139
    %v145 = vsel %vm142, %v134, -inf
    %146 = vmax.xlane.f32.xlu0 %v145
    %v147 = vpop.xlane.xlu0 %146
    %v148 = vsel %vm142, %v139, -inf
    %149 = vmax.xlane.f32.xlu0 %v148
    %v150 = vpop.xlane.xlu0 %149
    %v151 = vsub.f32 %v134, %v147
    %v152 = vsub.f32 %v139, %v150
    %v153 = vmul.f32 %v151, 1.442695
    %v154 = vpow.pop %v153
    %v155 = vmul.f32 %v152, 1.442695
    %v156 = vpow.pop %v155
    %v157 = vsel %vm142, %v154, 0.0
    %158 = vadd.xlane.f32.xlu0 %v157
    %v159 = vpop.xlane.xlu0 %158
    %v160 = vsel %vm142, %v156, 0.0
    %161 = vadd.xlane.f32.xlu0 %v160
    %v162 = vpop.xlane.xlu0 %161
    %v163 = vrcp.pop %v159
    %v164 = vmul.f32 %v154, %v163
    %v165 = vrcp.pop %v162
    %v166 = vmul.f32 %v156, %v165
    %v167 = vlaneseq
    %v168 = vand.u32 %v167, 127
    %v169 = vsel %vm142, %v164, -inf
    %170 = vmax.xlane.f32.xlu0 %v169
    %v171 = vpop.xlane.xlu0 %170
    %v172 = vsel %vm142, %v166, -inf
    %173 = vmax.xlane.f32.xlu0 %v172
    %v174 = vpop.xlane.xlu0 %173
    %vm175 = vcmp.ge.f32.partialorder %v164, %v171
    %vm176 = vcmp.ge.f32.partialorder %v166, %v174
    %v177 = vsel %vm175, %v168, 8
    %v178 = vsel %vm176, %v168, 8
    %v179 = vsel %vm142, %v177, 2147483647
    %v180 = vand.u32 %v179, 65535
    %v181 = vshra.s32 %v179, 16
    %v182 = vcvt.s32.f32 %v180
    %v183 = vcvt.s32.f32 %v181
    %184 = vmin.xlane.f32.xlu0 %v183
    %v185 = vpop.xlane.xlu0 %184
    %vm186 = vcmp.eq.f32.partialorder %v183, %v185
    %v187 = vsel %vm186, %v182, inf
    %188 = vmin.xlane.f32.xlu0 %v187
    %v189 = vpop.xlane.xlu0 %188
    %v190 = vcvt.f32.s32 %v189
    %v191 = vcvt.f32.s32 %v185
    %v192 = vshll.u32 %v191, 16
    %v193 = vadd.s32 %v192, %v190
    %v194 = vsel %vm142, %v178, 2147483647
    %v195 = vand.u32 %v194, 65535
    %v196 = vshra.s32 %v194, 16
    %v197 = vcvt.s32.f32 %v195
    %v198 = vcvt.s32.f32 %v196
    %199 = vmin.xlane.f32.xlu0 %v198
    %v200 = vpop.xlane.xlu0 %199
    %vm201 = vcmp.eq.f32.partialorder %v198, %v200
    %v202 = vsel %vm201, %v197, inf
    %203 = vmin.xlane.f32.xlu0 %v202
    %v204 = vpop.xlane.xlu0 %203
    %v205 = vcvt.f32.s32 %v204
    %v206 = vcvt.f32.s32 %v200
    %v207 = vshll.u32 %v206, 16
    %v208 = vadd.s32 %v207, %v205
    %vm209 = vcmp.eq.s32.totalorder %v168, %v193
    %vm210 = vcmp.eq.s32.totalorder %v168, %v208
    %v211 = vsel %vm209, 1.0, 0.0
    %v212 = vsel %vm210, 1.0, 0.0
    %v213 = vsel %vm209, -1.0, %v164
    %v214 = vsel %vm210, -1.0, %v166
    %v215 = vsel %vm142, %v213, -inf
    %216 = vmax.xlane.f32.xlu0 %v215
    %v217 = vpop.xlane.xlu0 %216
    %v218 = vsel %vm142, %v214, -inf
    %219 = vmax.xlane.f32.xlu0 %v218
    %v220 = vpop.xlane.xlu0 %219
    %vm221 = vcmp.ge.f32.partialorder %v213, %v217
    %vm222 = vcmp.ge.f32.partialorder %v214, %v220
    %v223 = vsel %vm221, %v168, 8
    %v224 = vsel %vm222, %v168, 8
    %v225 = vsel %vm142, %v223, 2147483647
    %v226 = vand.u32 %v225, 65535
    %v227 = vshra.s32 %v225, 16
    %v228 = vcvt.s32.f32 %v226
    %v229 = vcvt.s32.f32 %v227
    %230 = vmin.xlane.f32.xlu0 %v229
    %v231 = vpop.xlane.xlu0 %230
    %vm232 = vcmp.eq.f32.partialorder %v229, %v231
    %v233 = vsel %vm232, %v228, inf
    %234 = vmin.xlane.f32.xlu0 %v233
    %v235 = vpop.xlane.xlu0 %234
    %v236 = vcvt.f32.s32 %v235
    %v237 = vcvt.f32.s32 %v231
    %v238 = vshll.u32 %v237, 16
    %v239 = vadd.s32 %v238, %v236
    %v240 = vsel %vm142, %v224, 2147483647
    %v241 = vand.u32 %v240, 65535
    %v242 = vshra.s32 %v240, 16
    %v243 = vcvt.s32.f32 %v241
    %v244 = vcvt.s32.f32 %v242
    %245 = vmin.xlane.f32.xlu0 %v244
    %v246 = vpop.xlane.xlu0 %245
    %vm247 = vcmp.eq.f32.partialorder %v244, %v246
    %v248 = vsel %vm247, %v243, inf
    %249 = vmin.xlane.f32.xlu0 %v248
    %v250 = vpop.xlane.xlu0 %249
    %v251 = vcvt.f32.s32 %v250
    %v252 = vcvt.f32.s32 %v246
    %v253 = vshll.u32 %v252, 16
    %v254 = vadd.s32 %v253, %v251
    %vm255 = vcmp.eq.s32.totalorder %v168, %v239
    %vm256 = vcmp.eq.s32.totalorder %v168, %v254
    %v257 = vsel %vm255, 1.0, %v211
    %v258 = vsel %vm256, 1.0, %v212
    %v259 = vsel %vm255, -1.0, %v213
    %v260 = vsel %vm256, -1.0, %v214
    %v261 = vsel %vm142, %v259, -inf
    %262 = vmax.xlane.f32.xlu0 %v261
    %v263 = vpop.xlane.xlu0 %262
    %v264 = vsel %vm142, %v260, -inf
    %265 = vmax.xlane.f32.xlu0 %v264
    %v266 = vpop.xlane.xlu0 %265
    %vm267 = vcmp.ge.f32.partialorder %v259, %v263
    %vm268 = vcmp.ge.f32.partialorder %v260, %v266
    %v269 = vsel %vm267, %v168, 8
    %v270 = vsel %vm268, %v168, 8
    %v271 = vsel %vm142, %v269, 2147483647
    %v272 = vand.u32 %v271, 65535
    %v273 = vshra.s32 %v271, 16
    %v274 = vcvt.s32.f32 %v272
    %v275 = vcvt.s32.f32 %v273
    %276 = vmin.xlane.f32.xlu0 %v275
    %v277 = vpop.xlane.xlu0 %276
    %vm278 = vcmp.eq.f32.partialorder %v275, %v277
    %v279 = vsel %vm278, %v274, inf
    %280 = vmin.xlane.f32.xlu0 %v279
    %v281 = vpop.xlane.xlu0 %280
    %v282 = vcvt.f32.s32 %v281
    %v283 = vcvt.f32.s32 %v277
    %v284 = vshll.u32 %v283, 16
    %v285 = vadd.s32 %v284, %v282
    %v286 = vsel %vm142, %v270, 2147483647
    %v287 = vand.u32 %v286, 65535
    %v288 = vshra.s32 %v286, 16
    %v289 = vcvt.s32.f32 %v287
    %v290 = vcvt.s32.f32 %v288
    %291 = vmin.xlane.f32.xlu0 %v290
    %v292 = vpop.xlane.xlu0 %291
    %vm293 = vcmp.eq.f32.partialorder %v290, %v292
    %v294 = vsel %vm293, %v289, inf
    %295 = vmin.xlane.f32.xlu0 %v294
    %v296 = vpop.xlane.xlu0 %295
    %v297 = vcvt.f32.s32 %v296
    %v298 = vcvt.f32.s32 %v292
    %v299 = vshll.u32 %v298, 16
    %v300 = vadd.s32 %v299, %v297
    %vm301 = vcmp.eq.s32.totalorder %v168, %v285
    %vm302 = vcmp.eq.s32.totalorder %v168, %v300
    %v303 = vsel %vm301, 1.0, %v257
    %v304 = vsel %vm302, 1.0, %v258
    %v305 = vsel %vm301, -1.0, %v259
    %v306 = vsel %vm302, -1.0, %v260
    %v307 = vsel %vm142, %v305, -inf
    %308 = vmax.xlane.f32.xlu0 %v307
    %v309 = vpop.xlane.xlu0 %308
    %v310 = vsel %vm142, %v306, -inf
    %311 = vmax.xlane.f32.xlu0 %v310
    %v312 = vpop.xlane.xlu0 %311
    %vm313 = vcmp.ge.f32.partialorder %v305, %v309
    %vm314 = vcmp.ge.f32.partialorder %v306, %v312
    %v315 = vsel %vm313, %v168, 8
    %v316 = vsel %vm314, %v168, 8
    %v317 = vsel %vm142, %v315, 2147483647
    %v318 = vand.u32 %v317, 65535
    %v319 = vshra.s32 %v317, 16
    %v320 = vcvt.s32.f32 %v318
    %v321 = vcvt.s32.f32 %v319
    %322 = vmin.xlane.f32.xlu0 %v321
    %v323 = vpop.xlane.xlu0 %322
    %vm324 = vcmp.eq.f32.partialorder %v321, %v323
    %v325 = vsel %vm324, %v320, inf
    %326 = vmin.xlane.f32.xlu0 %v325
    %v327 = vpop.xlane.xlu0 %326
    %v328 = vcvt.f32.s32 %v327
    %v329 = vcvt.f32.s32 %v323
    %v330 = vshll.u32 %v329, 16
    %v331 = vadd.s32 %v330, %v328
    %v332 = vsel %vm142, %v316, 2147483647
    %v333 = vand.u32 %v332, 65535
    %v334 = vshra.s32 %v332, 16
    %v335 = vcvt.s32.f32 %v333
    %v336 = vcvt.s32.f32 %v334
    %337 = vmin.xlane.f32.xlu0 %v336
    %v338 = vpop.xlane.xlu0 %337
    %vm339 = vcmp.eq.f32.partialorder %v336, %v338
    %v340 = vsel %vm339, %v335, inf
    %341 = vmin.xlane.f32.xlu0 %v340
    %v342 = vpop.xlane.xlu0 %341
    %v343 = vcvt.f32.s32 %v342
    %v344 = vcvt.f32.s32 %v338
    %v345 = vshll.u32 %v344, 16
    %v346 = vadd.s32 %v345, %v343
    %vm347 = vcmp.eq.s32.totalorder %v168, %v331
    %vm348 = vcmp.eq.s32.totalorder %v168, %v346
    %v349 = vsel %vm347, 1.0, %v303
    %v350 = vsel %vm348, 1.0, %v304
    %v351 = vmul.f32 %v164, %v349
    %v352 = vmul.f32 %v166, %v350
    %v353 = vsel %vm142, %v351, 0.0
    %354 = vadd.xlane.f32.xlu0 %v353
    %v355 = vpop.xlane.xlu0 %354
    %v356 = vsel %vm142, %v352, 0.0
    %357 = vadd.xlane.f32.xlu0 %v356
    %v358 = vpop.xlane.xlu0 %357
    %v359 = vrcp.pop %v355
    %v360 = vmul.f32 %v351, %v359
    %v361 = vrcp.pop %v358
    %v362 = vmul.f32 %v352, %v361
    %v363 = vpack.c.bf16 %v48, %v47
    %v364 = vld [vmem:[%s3] sm:$0xff]
    %v365 = vld [vmem:[%s3 + $0x8] sm:$0xff]
    %v366 = vld [vmem:[%s3 + $0x10] sm:$0xff]
    %v367 = vld [vmem:[%s3 + $0x18] sm:$0xff]
    %v368 = vld [vmem:[%s4] sm:$0x3]
    %v370 = vlaneseq
    %v371 = vshrl.u32 %v370, 7
    %v372 = vsub.s32 0, %v371
    %v373 = vrot.slane %v368, %v372
    %v374 = vlaneseq
    %v375 = vshrl.u32 %v374, 7
    %v376 = vsub.s32 1, %v375
    %v377 = vrot.slane %v368, %v376
    %v384 = vunpack.c.l.b16 %v364
    %v385 = vunpack.c.h.b16 %v364
    %v386 = vunpack.c.l.b16 %v365
    %v387 = vunpack.c.h.b16 %v365
    %v388 = vunpack.c.l.b16 %v366
    %v389 = vunpack.c.h.b16 %v366
    %v390 = vunpack.c.l.b16 %v367
    %v391 = vunpack.c.h.b16 %v367
    %v392 = vpack.c.b16 %v386, %v384
    %v393 = vpack.c.b16 %v387, %v385
    %v394 = vpack.c.b16 %v390, %v388
    %v395 = vpack.c.b16 %v391, %v389
    %v401 = vsel %vm60, %v363, 0
    %403 = vmatprep.subr.bf16.mxu0 %v393
    %404 = vmatpush1.bf16.msra.mxu0 %v392
    %405 = vmatprep.subr.bf16.mxu0 %v395
    %406 = vmatpush1.bf16.msra.mxu0 %v394
    %407 = vmatprep.subr.bf16.mxu0 0
    %408 = vmatpush1.bf16.msra.mxu0 0
    %409 = vmatprep.subr.bf16.mxu0 0
    %410 = vmatpush1.bf16.msra.mxu0 0
    %411 = vmatprep.subr.bf16.mxu0 0
    %412 = vmatpush1.bf16.msra.mxu0 0
    %413 = vmatprep.subr.bf16.mxu0 0
    %414 = vmatpush1.bf16.msra.mxu0 0
    %415 = vmatprep.subr.bf16.mxu0 0
    %416 = vmatpush1.bf16.msra.mxu0 0
    %417 = vmatprep.subr.bf16.mxu0 0
    %418 = vmatpush1.bf16.msra.mxu0 0
    %419 = vmatprep.subr.bf16.mxu0 0
    %420 = vmatpush1.bf16.msra.mxu0 0
    %421 = vmatprep.subr.bf16.mxu0 0
    %422 = vmatpush1.bf16.msra.mxu0 0
    %423 = vmatprep.subr.bf16.mxu0 0
    %424 = vmatpush1.bf16.msra.mxu0 0
    %425 = vmatprep.subr.bf16.mxu0 0
    %426 = vmatpush1.bf16.msra.mxu0 0
    %427 = vmatprep.subr.bf16.mxu0 0
    %428 = vmatpush1.bf16.msra.mxu0 0
    %429 = vmatprep.subr.bf16.mxu0 0
    %430 = vmatpush1.bf16.msra.mxu0 0
    %431 = vmatprep.subr.bf16.mxu0 0
    %432 = vmatpush1.bf16.msra.mxu0 0
    %433 = vmatprep.subr.bf16.mxu0 0
    %434 = vmatpush1.bf16.msra.mxu0 0
    %435 = vmatprep.mubr.bf16.mxu0 0
    %436 = vmatmul.mubr.bf16.gmra.mrb[0].mxu0 %v401
    %v437 = vpop.f32.mrb[0].mxu0
    %v438 = vadd.f32 %v373, %v437
    %v439 = vpop.f32.mrb[0].mxu0
    %v440 = vadd.f32 %v377, %v439
    %v441 = vpop.f32.mrb[0].mxu0
    %v442 = vadd.f32 %v373, %v441
    %v443 = vpop.f32.mrb[0].mxu0
    %v444 = vadd.f32 %v377, %v443
    %445 = vdwg.mxu0
    %v446 = vmul.f32 %v438, 0.5
    %v447 = vmul.f32 %v440, 0.5
    %v448 = vmul.f32 %v442, 0.5
    %v449 = vmul.f32 %v444, 0.5
    %v450 = vmul.f32 %v438, 0.70710677
    %v451 = vmul.f32 %v440, 0.70710677
    %v452 = vmul.f32 %v442, 0.70710677
    %v453 = vmul.f32 %v444, 0.70710677
    %v454 = vand.u32 2147483647, %v450
    %v455 = vand.u32 2147483647, %v451
    %v456 = vand.u32 2147483647, %v452
    %v457 = vand.u32 2147483647, %v453
    %v458 = vmul.f32 %v454, 0.3275911
    %v459 = vmul.f32 %v455, 0.3275911
    %v460 = vmul.f32 %v456, 0.3275911
    %v461 = vmul.f32 %v457, 0.3275911
    %v462 = vadd.f32 %v458, 1.0
    %v463 = vadd.f32 %v459, 1.0
    %v464 = vadd.f32 %v460, 1.0
    %v465 = vadd.f32 %v461, 1.0
    %v466 = vrcp.pop %v462
    %v467 = vmul.f32 1.0, %v466
    %v468 = vrcp.pop %v463
    %v469 = vmul.f32 1.0, %v468
    %v470 = vrcp.pop %v464
    %v471 = vmul.f32 1.0, %v470
    %v472 = vrcp.pop %v465
    %v473 = vmul.f32 1.0, %v472
    %v474 = vmul.f32 %v467, 1.0614054
    %v475 = vmul.f32 %v469, 1.0614054
    %v476 = vmul.f32 %v471, 1.0614054
    %v477 = vmul.f32 %v473, 1.0614054
    %v478 = vadd.f32 %v474, -1.4531521
    %v479 = vadd.f32 %v475, -1.4531521
    %v480 = vadd.f32 %v476, -1.4531521
    %v481 = vadd.f32 %v477, -1.4531521
    %v482 = vmul.f32 %v478, %v467
    %v483 = vmul.f32 %v479, %v469
    %v484 = vmul.f32 %v480, %v471
    %v485 = vmul.f32 %v481, %v473
    %v486 = vadd.f32 %v482, 1.4214138
    %v487 = vadd.f32 %v483, 1.4214138
    %v488 = vadd.f32 %v484, 1.4214138
    %v489 = vadd.f32 %v485, 1.4214138
    %v490 = vmul.f32 %v486, %v467
    %v491 = vmul.f32 %v487, %v469
    %v492 = vmul.f32 %v488, %v471
    %v493 = vmul.f32 %v489, %v473
    %v494 = vadd.f32 %v490, -0.28449672
    %v495 = vadd.f32 %v491, -0.28449672
    %v496 = vadd.f32 %v492, -0.28449672
    %v497 = vadd.f32 %v493, -0.28449672
    %v498 = vmul.f32 %v494, %v467
    %v499 = vmul.f32 %v495, %v469
    %v500 = vmul.f32 %v496, %v471
    %v501 = vmul.f32 %v497, %v473
    %v502 = vadd.f32 %v498, 0.2548296
    %v503 = vadd.f32 %v499, 0.2548296
    %v504 = vadd.f32 %v500, 0.2548296
    %v505 = vadd.f32 %v501, 0.2548296
    %v506 = vmul.f32 %v502, %v467
    %v507 = vmul.f32 %v503, %v469
    %v508 = vmul.f32 %v504, %v471
    %v509 = vmul.f32 %v505, %v473
    %v510 = vsub.f32 0.0, %v454
    %v511 = vsub.f32 0.0, %v455
    %v512 = vsub.f32 0.0, %v456
    %v513 = vsub.f32 0.0, %v457
    %v514 = vmul.f32 %v510, %v454
    %v515 = vmul.f32 %v511, %v455
    %v516 = vmul.f32 %v512, %v456
    %v517 = vmul.f32 %v513, %v457
    %v518 = vmul.f32 %v514, 1.442695
    %v519 = vpow.pop %v518
    %v520 = vmul.f32 %v515, 1.442695
    %v521 = vpow.pop %v520
    %v522 = vmul.f32 %v516, 1.442695
    %v523 = vpow.pop %v522
    %v524 = vmul.f32 %v517, 1.442695
    %v525 = vpow.pop %v524
    %v526 = vmul.f32 %v506, %v519
    %v527 = vmul.f32 %v507, %v521
    %v528 = vmul.f32 %v508, %v523
    %v529 = vmul.f32 %v509, %v525
    %v530 = vsub.f32 1.0, %v526
    %v531 = vsub.f32 1.0, %v527
    %v532 = vsub.f32 1.0, %v528
    %v533 = vsub.f32 1.0, %v529
    %vm534 = vcmp.lt.f32.partialorder %v450, 0.0
    %vm535 = vcmp.lt.f32.partialorder %v451, 0.0
    %vm536 = vcmp.lt.f32.partialorder %v452, 0.0
    %vm537 = vcmp.lt.f32.partialorder %v453, 0.0
    %v538 = vsub.f32 0.0, %v530
    %v539 = vsub.f32 0.0, %v531
    %v540 = vsub.f32 0.0, %v532
    %v541 = vsub.f32 0.0, %v533
    %v542 = vsel %vm534, %v538, %v530
    %v543 = vsel %vm535, %v539, %v531
    %v544 = vsel %vm536, %v540, %v532
    %v545 = vsel %vm537, %v541, %v533
    %v546 = vadd.f32 %v542, 1.0
    %v547 = vadd.f32 %v543, 1.0
    %v548 = vadd.f32 %v544, 1.0
    %v549 = vadd.f32 %v545, 1.0
    %v550 = vmul.f32 %v446, %v546
    %v551 = vmul.f32 %v447, %v547
    %v552 = vmul.f32 %v448, %v548
    %v553 = vmul.f32 %v449, %v549
    %v554 = vld [vmem:[%s7] sm:$0xff]
    %v555 = vld [vmem:[%s7 + $0x8] sm:$0xff]
    %v557 = vsel %vm142, %v360, 0
    %v560 = vsel %vm142, %v362, 0
    %562 = vmatprep.subr.mxu0 %v555
    %563 = vmatpush1.msra.mxu0 %v554
    %564 = vmatprep.subr.mxu0 0.0
    %565 = vmatpush1.msra.mxu0 0.0
    %566 = vmatprep.subr.mxu0 0.0
    %567 = vmatpush1.msra.mxu0 0.0
    %568 = vmatprep.subr.mxu0 0.0
    %569 = vmatpush1.msra.mxu0 0.0
    %570 = vmatprep.subr.mxu0 0.0
    %571 = vmatpush1.msra.mxu0 0.0
    %572 = vmatprep.subr.mxu0 0.0
    %573 = vmatpush1.msra.mxu0 0.0
    %574 = vmatprep.subr.mxu0 0.0
    %575 = vmatpush1.msra.mxu0 0.0
    %576 = vmatprep.subr.mxu0 0.0
    %577 = vmatpush1.msra.mxu0 0.0
    %578 = vmatprep.subr.mxu0 0.0
    %579 = vmatpush1.msra.mxu0 0.0
    %580 = vmatprep.subr.mxu0 0.0
    %581 = vmatpush1.msra.mxu0 0.0
    %582 = vmatprep.subr.mxu0 0.0
    %583 = vmatpush1.msra.mxu0 0.0
    %584 = vmatprep.subr.mxu0 0.0
    %585 = vmatpush1.msra.mxu0 0.0
    %586 = vmatprep.subr.mxu0 0.0
    %587 = vmatpush1.msra.mxu0 0.0
    %588 = vmatprep.subr.mxu0 0.0
    %589 = vmatpush1.msra.mxu0 0.0
    %590 = vmatprep.subr.mxu0 0.0
    %591 = vmatpush1.msra.mxu0 0.0
    %592 = vmatprep.subr.mxu0 0.0
    %593 = vmatpush1.msra.mxu0 0.0
    %594 = vmatprep.subr.mxu0 0.0
    %595 = vmatpush1.msra.mxu0 0.0
    %596 = vmatprep.subr.mxu0 0.0
    %597 = vmatpush1.msra.mxu0 0.0
    %598 = vmatprep.subr.mxu0 0.0
    %599 = vmatpush1.msra.mxu0 0.0
    %600 = vmatprep.subr.mxu0 0.0
    %601 = vmatpush1.msra.mxu0 0.0
    %602 = vmatprep.subr.mxu0 0.0
    %603 = vmatpush1.msra.mxu0 0.0
    %604 = vmatprep.subr.mxu0 0.0
    %605 = vmatpush1.msra.mxu0 0.0
    %606 = vmatprep.subr.mxu0 0.0
    %607 = vmatpush1.msra.mxu0 0.0
    %608 = vmatprep.subr.mxu0 0.0
    %609 = vmatpush1.msra.mxu0 0.0
    %610 = vmatprep.subr.mxu0 0.0
    %611 = vmatpush1.msra.mxu0 0.0
    %612 = vmatprep.subr.mxu0 0.0
    %613 = vmatpush1.msra.mxu0 0.0
    %614 = vmatprep.subr.mxu0 0.0
    %615 = vmatpush1.msra.mxu0 0.0
    %616 = vmatprep.subr.mxu0 0.0
    %617 = vmatpush1.msra.mxu0 0.0
    %618 = vmatprep.subr.mxu0 0.0
    %619 = vmatpush1.msra.mxu0 0.0
    %620 = vmatprep.subr.mxu0 0.0
    %621 = vmatpush1.msra.mxu0 0.0
    %622 = vmatprep.subr.mxu0 0.0
    %623 = vmatpush1.msra.mxu0 0.0
    %624 = vmatprep.subr.mxu0 0.0
    %625 = vmatpush1.msra.mxu0 0.0
    %626 = vmatprep.mubr.f32.mxu0 0.0
    %627 = vmatmul.mubr.f32.gmra.mrb[0].mxu0 %v557
    %v628 = vpop.f32.mrb[0].mxu0
    %v629 = vadd.f32 0.0, %v628
    %v630 = vpop.f32.mrb[0].mxu0
    %v631 = vadd.f32 0.0, %v630
    %632 = vmatprep.mubr.f32.mxu0 0.0
    %633 = vmatmul.mubr.f32.gmra.mrb[0].mxu0 %v560
    %v634 = vpop.f32.mrb[0].mxu0
    %v635 = vadd.f32 0.0, %v634
    %v636 = vpop.f32.mrb[0].mxu0
    %v637 = vadd.f32 0.0, %v636
    %638 = vdwg.mxu0
    %v639 = vmul.f32 %v550, %v629
    %v640 = vmul.f32 %v551, %v631
    %v641 = vmul.f32 %v552, %v635
    %v642 = vmul.f32 %v553, %v637
    %v643 = vpack.c.bf16 %v641, %v639
    %v644 = vpack.c.bf16 %v642, %v640
    %v645 = vld [vmem:[#allocation2] sm:$0xf]
    %v646 = vld [vmem:[#allocation2 + $0x4] sm:$0xf]
    %v647 = vld [vmem:[#allocation2 + $0x8] sm:$0xf]
    %v648 = vld [vmem:[#allocation2 + $0xc] sm:$0xf]
    %v649 = vld [vmem:[#allocation2 + $0x10] sm:$0xf]
    %v650 = vld [vmem:[#allocation2 + $0x14] sm:$0xf]
    %v651 = vld [vmem:[#allocation2 + $0x18] sm:$0xf]
    %v652 = vld [vmem:[#allocation2 + $0x1c] sm:$0xf]
    %v653 = vld [vmem:[#allocation2 + $0x20] sm:$0xf]
    %v654 = vld [vmem:[#allocation2 + $0x24] sm:$0xf]
    %v655 = vld [vmem:[#allocation2 + $0x28] sm:$0xf]
    %v656 = vld [vmem:[#allocation2 + $0x2c] sm:$0xf]
    %v657 = vld [vmem:[#allocation2 + $0x30] sm:$0xf]
    %v658 = vld [vmem:[#allocation2 + $0x34] sm:$0xf]
    %v659 = vld [vmem:[#allocation2 + $0x38] sm:$0xf]
    %v660 = vld [vmem:[#allocation2 + $0x3c] sm:$0xf]
    %v661 = vld [vmem:[#allocation2 + $0x40] sm:$0xf]
    %v662 = vld [vmem:[#allocation2 + $0x44] sm:$0xf]
    %v663 = vld [vmem:[#allocation2 + $0x48] sm:$0xf]
    %v664 = vld [vmem:[#allocation2 + $0x4c] sm:$0xf]
    %v665 = vld [vmem:[#allocation2 + $0x50] sm:$0xf]
    %v666 = vld [vmem:[#allocation2 + $0x54] sm:$0xf]
    %v667 = vld [vmem:[#allocation2 + $0x58] sm:$0xf]
    %v668 = vld [vmem:[#allocation2 + $0x5c] sm:$0xf]
    %v669 = vld [vmem:[#allocation2 + $0x60] sm:$0xf]
    %v670 = vld [vmem:[#allocation2 + $0x64] sm:$0xf]
    %v671 = vld [vmem:[#allocation2 + $0x68] sm:$0xf]
    %v672 = vld [vmem:[#allocation2 + $0x6c] sm:$0xf]
    %v673 = vld [vmem:[#allocation2 + $0x70] sm:$0xf]
    %v674 = vld [vmem:[#allocation2 + $0x74] sm:$0xf]
    %v675 = vld [vmem:[#allocation2 + $0x78] sm:$0xf]
    %v676 = vld [vmem:[#allocation2 + $0x7c] sm:$0xf]
    %v677 = vld [vmem:[%s6] sm:$0xff]
    %678 = vmatprep.subr.mxu0 0.0
    %679 = vmatpush1.msra.mxu0 %v677
    %680 = vmatprep.subr.mxu0 0.0
    %681 = vmatpush1.msra.mxu0 0.0
    %682 = vmatprep.subr.mxu0 0.0
    %683 = vmatpush1.msra.mxu0 0.0
    %684 = vmatprep.subr.mxu0 0.0
    %685 = vmatpush1.msra.mxu0 0.0
    %686 = vmatprep.subr.mxu0 0.0
    %687 = vmatpush1.msra.mxu0 0.0
    %688 = vmatprep.subr.mxu0 0.0
    %689 = vmatpush1.msra.mxu0 0.0
    %690 = vmatprep.subr.mxu0 0.0
    %691 = vmatpush1.msra.mxu0 0.0
    %692 = vmatprep.subr.mxu0 0.0
    %693 = vmatpush1.msra.mxu0 0.0
    %694 = vmatprep.subr.mxu0 0.0
    %695 = vmatpush1.msra.mxu0 0.0
    %696 = vmatprep.subr.mxu0 0.0
    %697 = vmatpush1.msra.mxu0 0.0
    %698 = vmatprep.subr.mxu0 0.0
    %699 = vmatpush1.msra.mxu0 0.0
    %700 = vmatprep.subr.mxu0 0.0
    %701 = vmatpush1.msra.mxu0 0.0
    %702 = vmatprep.subr.mxu0 0.0
    %703 = vmatpush1.msra.mxu0 0.0
    %704 = vmatprep.subr.mxu0 0.0
    %705 = vmatpush1.msra.mxu0 0.0
    %706 = vmatprep.subr.mxu0 0.0
    %707 = vmatpush1.msra.mxu0 0.0
    %708 = vmatprep.subr.mxu0 0.0
    %709 = vmatpush1.msra.mxu0 0.0
    %710 = vmatprep.subr.mxu0 0.0
    %711 = vmatpush1.msra.mxu0 0.0
    %712 = vmatprep.subr.mxu0 0.0
    %713 = vmatpush1.msra.mxu0 0.0
    %714 = vmatprep.subr.mxu0 0.0
    %715 = vmatpush1.msra.mxu0 0.0
    %716 = vmatprep.subr.mxu0 0.0
    %717 = vmatpush1.msra.mxu0 0.0
    %718 = vmatprep.subr.mxu0 0.0
    %719 = vmatpush1.msra.mxu0 0.0
    %720 = vmatprep.subr.mxu0 0.0
    %721 = vmatpush1.msra.mxu0 0.0
    %722 = vmatprep.subr.mxu0 0.0
    %723 = vmatpush1.msra.mxu0 0.0
    %724 = vmatprep.subr.mxu0 0.0
    %725 = vmatpush1.msra.mxu0 0.0
    %726 = vmatprep.subr.mxu0 0.0
    %727 = vmatpush1.msra.mxu0 0.0
    %728 = vmatprep.subr.mxu0 0.0
    %729 = vmatpush1.msra.mxu0 0.0
    %730 = vmatprep.subr.mxu0 0.0
    %731 = vmatpush1.msra.mxu0 0.0
    %732 = vmatprep.subr.mxu0 0.0
    %733 = vmatpush1.msra.mxu0 0.0
    %734 = vmatprep.subr.mxu0 0.0
    %735 = vmatpush1.msra.mxu0 0.0
    %736 = vmatprep.subr.mxu0 0.0
    %737 = vmatpush1.msra.mxu0 0.0
    %738 = vmatprep.subr.mxu0 0.0
    %739 = vmatpush1.msra.mxu0 0.0
    %740 = vmatprep.subr.mxu0 0.0
    %741 = vmatpush1.msra.mxu0 0.0
    %742 = vmatprep.mubr.f32.mxu0 0.0
    %743 = vmatmul.mubr.f32.gmra.mrb[0].mxu0 %v557
    %v744 = vpop.f32.mrb[0].mxu0
    %v745 = vadd.f32 0.0, %v744
    %v746 = vpop.f32.mrb[0].mxu0
    %747 = vmatprep.mubr.f32.mxu0 0.0
    %748 = vmatmul.mubr.f32.gmra.mrb[0].mxu0 %v560
    %v749 = vpop.f32.mrb[0].mxu0
    %v750 = vadd.f32 0.0, %v749
    %v751 = vpop.f32.mrb[0].mxu0
    %752 = vdwg.mxu0
    %v785 = vunpack.c.l.b16 %v645
    %v786 = vunpack.c.l.b16 %v646
    %v787 = vunpack.c.l.b16 %v647
    %v788 = vunpack.c.l.b16 %v648
    %v789 = vunpack.c.l.b16 %v649
    %v790 = vunpack.c.l.b16 %v650
    %v791 = vunpack.c.l.b16 %v651
    %v792 = vunpack.c.l.b16 %v652
    %v793 = vunpack.c.l.b16 %v653
    %v794 = vunpack.c.l.b16 %v654
    %v795 = vunpack.c.l.b16 %v655
    %v796 = vunpack.c.l.b16 %v656
    %v797 = vunpack.c.l.b16 %v657
    %v798 = vunpack.c.l.b16 %v658
    %v799 = vunpack.c.l.b16 %v659
    %v800 = vunpack.c.l.b16 %v660
    %v801 = vunpack.c.l.b16 %v661
    %v802 = vunpack.c.l.b16 %v662
    %v803 = vunpack.c.l.b16 %v663
    %v804 = vunpack.c.l.b16 %v664
    %v805 = vunpack.c.l.b16 %v665
    %v806 = vunpack.c.l.b16 %v666
    %v807 = vunpack.c.l.b16 %v667
    %v808 = vunpack.c.l.b16 %v668
    %v809 = vunpack.c.l.b16 %v669
    %v810 = vunpack.c.l.b16 %v670
    %v811 = vunpack.c.l.b16 %v671
    %v812 = vunpack.c.l.b16 %v672
    %v813 = vunpack.c.l.b16 %v673
    %v814 = vunpack.c.l.b16 %v674
    %v815 = vunpack.c.l.b16 %v675
    %v816 = vunpack.c.l.b16 %v676
    %v817 = vpack.c.b16 %v786, %v785
    %v818 = vpack.c.b16 %v788, %v787
    %v819 = vpack.c.b16 %v790, %v789
    %v820 = vpack.c.b16 %v792, %v791
    %v821 = vpack.c.b16 %v794, %v793
    %v822 = vpack.c.b16 %v796, %v795
    %v823 = vpack.c.b16 %v798, %v797
    %v824 = vpack.c.b16 %v800, %v799
    %v825 = vpack.c.b16 %v802, %v801
    %v826 = vpack.c.b16 %v804, %v803
    %v827 = vpack.c.b16 %v806, %v805
    %v828 = vpack.c.b16 %v808, %v807
    %v829 = vpack.c.b16 %v810, %v809
    %v830 = vpack.c.b16 %v812, %v811
    %v831 = vpack.c.b16 %v814, %v813
    %v832 = vpack.c.b16 %v816, %v815
    %849 = vmatprep.subr.bf16.mxu0 0
    %850 = vmatpush1.bf16.msra.mxu0 %v817
    %851 = vmatprep.subr.bf16.mxu0 0
    %852 = vmatpush1.bf16.msra.mxu0 %v818
    %853 = vmatprep.subr.bf16.mxu0 0
    %854 = vmatpush1.bf16.msra.mxu0 %v819
    %855 = vmatprep.subr.bf16.mxu0 0
    %856 = vmatpush1.bf16.msra.mxu0 %v820
    %857 = vmatprep.subr.bf16.mxu0 0
    %858 = vmatpush1.bf16.msra.mxu0 %v821
    %859 = vmatprep.subr.bf16.mxu0 0
    %860 = vmatpush1.bf16.msra.mxu0 %v822
    %861 = vmatprep.subr.bf16.mxu0 0
    %862 = vmatpush1.bf16.msra.mxu0 %v823
    %863 = vmatprep.subr.bf16.mxu0 0
    %864 = vmatpush1.bf16.msra.mxu0 %v824
    %865 = vmatprep.subr.bf16.mxu0 0
    %866 = vmatpush1.bf16.msra.mxu0 %v825
    %867 = vmatprep.subr.bf16.mxu0 0
    %868 = vmatpush1.bf16.msra.mxu0 %v826
    %869 = vmatprep.subr.bf16.mxu0 0
    %870 = vmatpush1.bf16.msra.mxu0 %v827
    %871 = vmatprep.subr.bf16.mxu0 0
    %872 = vmatpush1.bf16.msra.mxu0 %v828
    %873 = vmatprep.subr.bf16.mxu0 0
    %874 = vmatpush1.bf16.msra.mxu0 %v829
    %875 = vmatprep.subr.bf16.mxu0 0
    %876 = vmatpush1.bf16.msra.mxu0 %v830
    %877 = vmatprep.subr.bf16.mxu0 0
    %878 = vmatpush1.bf16.msra.mxu0 %v831
    %879 = vmatprep.subr.bf16.mxu0 0
    %880 = vmatpush1.bf16.msra.mxu0 %v832
    %881 = vmatprep.mubr.bf16.mxu0 %v644
    %882 = vmatmul.mubr.bf16.gmra.mrb[0].mxu0 %v643
    %v883 = vpop.f32.mrb[0].mxu0
    %v884 = vadd.f32 %v745, %v883
    %v885 = vpop.f32.mrb[0].mxu0
    %v886 = vpop.f32.mrb[0].mxu0
    %v887 = vadd.f32 %v750, %v886
    %v888 = vpop.f32.mrb[0].mxu0
    %889 = vdwg.mxu0
    %890 = vst.msk [vmem:[#allocation5] sm:$0xff] %vm60, %v884
    %891 = vst.msk [vmem:[#allocation5 + $0x8] sm:$0xff] %vm60, %v887
    // Predicated region
    $region38: #{_lambda_.1} parent=1 // pred_check
      _
    $region39: #{_lambda_.1} parent=1 // pred_check_branch
      %893 = sbr.rel (0) target = $region41
    $region40: #{_lambda_.1} parent=1 // pred_region
      %s895 = ssub.s32 256, 256
      %896 = vsyncadd [#allocation4], %s895
      %s897 = sshll.u32 [#allocation5], 4
      %s898 = int_to_ptr.vmem [resolvable:$true] %s897
      %903 = dma.vmem_to_hbm [thread:$0]  %s898, 256, %s8, [#allocation4], 128, 128, 8
    $region41: #{_lambda_.1} parent=1 // pred_fallthru
      _
    // Predicated region
    $region42: #{_lambda_.1} parent=1 // pred_check
      _
    $region43: #{_lambda_.1} parent=1 // pred_check_branch
      %905 = sbr.rel (0) target = $region45
    $region44: #{_lambda_.1} parent=1 // pred_region
      _
    $region45: #{_lambda_.1} parent=1 // pred_fallthru
      _
    // Predicated region
    $region46: #{_lambda_.1} parent=1 // pred_check
      _
    $region47: #{_lambda_.1} parent=1 // pred_check_branch
      %907 = sbr.rel (0) target = $region49
    $region48: #{_lambda_.1} parent=1 // pred_region
      %908 = dma.done [#allocation4], 256
    $region49: #{_lambda_.1} parent=1 // pred_fallthru
      _
    // Predicated region
    $region50: #{_lambda_.1} parent=1 // pred_check
      _
    $region51: #{_lambda_.1} parent=1 // pred_check_branch
      %910 = sbr.rel (0) target = $region53
    $region52: #{_lambda_.1} parent=1 // pred_region
      _
    $region53: #{_lambda_.1} parent=1 // pred_fallthru
      _
    %911 = vsyncpa [#allocation3], 1
    %912 = vsyncpa [#allocation4], 1

</llo_original>
